<compile_context>
chip_gen: v7x
topology: tpu7x:2x2x1
jax: 0.10.0
libtpu: 0.0.40
codegen_flags: <defaults>
</compile_context>

<pallas_src>
import jax
import jax.numpy as jnp
from jax.experimental import pallas as pl
from jax.experimental.pallas import tpu as pltpu


def _round_up(x, m):
    return (x + m - 1) // m * m


# --------------------------------------------------------------------------
# Pallas kernel: one (tm, tn) output tile = one full-K im2col matmul + bias.
# --------------------------------------------------------------------------
def _downsample_matmul_kernel(x_ref, w_ref, b_ref, o_ref):
    # x_ref: (tm, K)   im2col activation tile (bf16 by default)
    # w_ref: (K, tn)   im2col weights (constant block index -> VMEM-resident)
    # b_ref: (1, tn)   bias (f32)
    # o_ref: (tm, tn)  output tile
    acc = jnp.dot(x_ref[...], w_ref[...], preferred_element_type=jnp.float32)
    o_ref[...] = (acc + b_ref[...]).astype(o_ref.dtype)


# --------------------------------------------------------------------------
# Wrapper: pad + stride-2 3x3 conv (PyTorch Downsample.forward semantics)
# --------------------------------------------------------------------------
def downsample_forward(x_nchw, w, b, *, compute_dtype=jnp.bfloat16):
    """x_nchw: (B, C, H, W).  w: (C_out, C_in, 3, 3) PyTorch layout.  b: (C_out,).

    Returns the NCHW output of: F.pad(x, (0,1,0,1)) -> Conv2d(k=3, stride=2, pad=0).
    `compute_dtype` casts the MXU inputs (default bf16; pass None to keep the
    input dtype).  Accumulation is always f32; output keeps x's dtype.
    """
    B, C, H, W = x_nchw.shape
    C_out, C_in, kh, kw = w.shape
    assert (kh, kw) == (3, 3) and C_in == C

    out_dtype = x_nchw.dtype

    # ---- layout + asymmetric zero pad (right/bottom by 1), NHWC internally ----
    # TODO(synk): drop the boundary transposes if the surrounding model is NHWC.
    x = jnp.transpose(x_nchw, (0, 2, 3, 1))                 # (B, H, W, C)
    xp = jnp.pad(x, ((0, 0), (0, 1), (0, 1), (0, 0)))       # (B, H+1, W+1, C)
    Hp, Wp = H + 1, W + 1
    Ho = (Hp - 3) // 2 + 1
    Wo = (Wp - 3) // 2 + 1
    M = B * Ho * Wo
    K = 9 * C_in

    # ---- im2col (tap-major, channel-minor): (M, 9*C_in)  (data-movement glue) ----
    # TODO(synk): fold this stride-2 tap extraction into the kernel (haloed
    # spatial BlockSpec / manual DMA) to avoid materializing the ~2.25x stack.
    taps = []
    for dy in range(3):
        for dx in range(3):
            taps.append(xp[:, dy:dy + 2 * Ho:2, dx:dx + 2 * Wo:2, :])
    x_mat = jnp.concatenate(taps, axis=-1).reshape(M, K)     # (M, 9*C_in)
    # weight rows match the im2col column order: (dy, dx, ci) -> co
    w_mat = jnp.transpose(w, (2, 3, 1, 0)).reshape(K, C_out)

    if compute_dtype is not None:
        x_mat = x_mat.astype(compute_dtype)
        w_mat = w_mat.astype(compute_dtype)
    in_bytes = jnp.dtype(x_mat.dtype).itemsize
    out_itemsize = jnp.dtype(out_dtype).itemsize

    # ---- tiling: lane-dense N, single N tile for typical codec widths ----
    N_pad = _round_up(C_out, 128)
    if N_pad <= 512:
        tn = N_pad                           # N_tiles == 1: weights fully resident
    elif N_pad % 512 == 0:
        tn = 512
    elif N_pad % 256 == 0:
        tn = 256
    else:
        tn = 128

    # M tile: large to amortize per-grid-step overhead; keep >= 2 tiles for the
    # v7x megacore when there is enough work; multiple of 16 for bf16 packing.
    if M >= 1024:
        tm = 512
    elif M >= 256:
        tm = _round_up((M + 1) // 2, 16)     # two M tiles -> both TensorCores busy
    else:
        tm = _round_up(max(M, 16), 16)

    # ---- VMEM budget (v7x: only 64 MiB/TC) --------------------------------
    def vmem_needed(tm_):
        return (2 * tm_ * K * in_bytes        # activation tile, double-buffered
                + 2 * K * tn * in_bytes       # weights (2 bufs allocated)
                + 2 * tn * 4                  # bias (f32)
                + 2 * tm_ * tn * out_itemsize)  # output tile, double-buffered

    while vmem_needed(tm) > 44 * 1024 * 1024 and tm > 64:
        tm = max(64, _round_up(tm // 2, 16))
    vmem_limit = int(min(max(vmem_needed(tm) * 5 // 4, 32 * 1024 * 1024),
                         48 * 1024 * 1024))

    M_pad = _round_up(M, tm)
    m_tiles = M_pad // tm
    n_tiles = N_pad // tn

    x_mat = jnp.pad(x_mat, ((0, M_pad - M), (0, 0)))
    w_mat = jnp.pad(w_mat, ((0, 0), (0, N_pad - C_out)))
    b_pad = jnp.pad(b.astype(jnp.float32), (0, N_pad - C_out)).reshape(1, N_pad)

    # HBM traffic: activations stream once; weights fetched once when n_tiles == 1
    # (constant block index -> revisit, no re-DMA), else once per grid step.
    w_fetches = 1 if n_tiles == 1 else m_tiles * n_tiles
    cost = pl.CostEstimate(
        flops=2 * M_pad * K * N_pad,
        transcendentals=0,
        bytes_accessed=(M_pad * K * in_bytes
                        + w_fetches * K * tn * in_bytes
                        + M_pad * N_pad * out_itemsize),
    )

    out = pl.pallas_call(
        _downsample_matmul_kernel,
        out_shape=jax.ShapeDtypeStruct((M_pad, N_pad), out_dtype),
        grid_spec=pltpu.PrefetchScalarGridSpec(
            num_scalar_prefetch=0,
            grid=(m_tiles, n_tiles),
            in_specs=[
                pl.BlockSpec((tm, K), lambda i, j: (i, 0)),   # activations
                pl.BlockSpec((K, tn), lambda i, j: (0, j)),   # weights (resident)
                pl.BlockSpec((1, tn), lambda i, j: (0, j)),   # bias
            ],
            out_specs=pl.BlockSpec((tm, tn), lambda i, j: (i, j)),
        ),
        compiler_params=pltpu.CompilerParams(
            dimension_semantics=("parallel", "parallel"),
            vmem_limit_bytes=vmem_limit,
        ),
        cost_estimate=cost,
    )(x_mat, w_mat, b_pad)

    out = out[:M, :C_out].reshape(B, Ho, Wo, C_out)
    return jnp.transpose(out, (0, 3, 1, 2))                   # back to NCHW


# --------------------------------------------------------------------------
# Pure-JAX reference (for verification only)
# --------------------------------------------------------------------------
def _downsample_reference(x_nchw, w, b):
    out = jax.lax.conv_general_dilated(
        x_nchw, w, window_strides=(2, 2), padding=[(0, 1), (0, 1)],
        dimension_numbers=("NCHW", "OIHW", "NCHW"))
    return out + b.reshape(1, -1, 1, 1)


# --------------------------------------------------------------------------
if __name__ == "__main__":
    key = jax.random.PRNGKey(0)
    kx, kw, kb = jax.random.split(key, 3)

    B, C, H, W = 2, 4, 16, 16
    x = jax.random.normal(kx, (B, C, H, W), jnp.float32)
    conv_w = jax.random.normal(kw, (C, C, 3, 3), jnp.float32) * 0.1
    conv_b = jax.random.normal(kb, (C,), jnp.float32) * 0.1

    Ho = (H + 1 - 3) // 2 + 1
    Wo = (W + 1 - 3) // 2 + 1

    ref = jax.block_until_ready(_downsample_reference(x, conv_w, conv_b))

    # Default path: bf16 MXU inputs, f32 accumulation.
    out_bf16 = jax.block_until_ready(downsample_forward(x, conv_w, conv_b))
    assert out_bf16.shape == (B, C, Ho, Wo), out_bf16.shape
    assert bool(jnp.all(jnp.isfinite(out_bf16)))
    assert jnp.allclose(out_bf16, ref, rtol=5e-2, atol=5e-2), float(
        jnp.max(jnp.abs(out_bf16 - ref)))

    # Full-precision path for a tight numerical check.
    out_f32 = jax.block_until_ready(
        downsample_forward(x, conv_w, conv_b, compute_dtype=None))
    assert jnp.allclose(out_f32, ref, rtol=1e-5, atol=1e-5), float(
        jnp.max(jnp.abs(out_f32 - ref)))

    print("KERNEL_OK")
</pallas_src>

<mosaic_0001>
module attributes {stable_mosaic.version = 11 : i64} {
  func.func @_downsample_matmul_kernel(%arg0: i32, %arg1: i32, %arg2: memref<128x36xbf16, #tpu.memory_space<vmem>>, %arg3: memref<36x128xbf16, #tpu.memory_space<vmem>>, %arg4: memref<1x128xf32, #tpu.memory_space<vmem>>, %arg5: memref<128x128xf32, #tpu.memory_space<vmem>>) attributes {dimension_semantics = [#tpu.dimension_semantics<parallel>, #tpu.dimension_semantics<parallel>], iteration_bounds = array<i64: 1, 1>, scalar_prefetch = 0 : i64, scratch_operands = 0 : i64, tpu.core_type = #tpu.core_type<tc>, window_params = [{transform_indices = @transform_0, window_bounds = array<i64: 128, 36>}, {transform_indices = @transform_1, window_bounds = array<i64: 36, 128>}, {transform_indices = @transform_2, window_bounds = array<i64: 1, 128>}, {transform_indices = @transform_3, window_bounds = array<i64: 128, 128>}]} {
    %c0 = arith.constant 0 : index
    %c0_0 = arith.constant 0 : index
    %0 = vector.load %arg2[%c0, %c0_0] : memref<128x36xbf16, #tpu.memory_space<vmem>>, vector<128x36xbf16>
    %c0_1 = arith.constant 0 : index
    %c0_2 = arith.constant 0 : index
    %1 = vector.load %arg3[%c0_1, %c0_2] : memref<36x128xbf16, #tpu.memory_space<vmem>>, vector<36x128xbf16>
    %cst = arith.constant dense<0.000000e+00> : vector<128x128xf32>
    %2 = tpu.matmul %0, %1, %cst {dimension_numbers = #tpu.dot_dimension_numbers<[1], [0], [0], [1], [0, 0, 1, 1], [], []>} : vector<128x36xbf16>, vector<36x128xbf16>, vector<128x128xf32> -> vector<128x128xf32>
    %c0_3 = arith.constant 0 : index
    %c0_4 = arith.constant 0 : index
    %3 = vector.load %arg4[%c0_3, %c0_4] : memref<1x128xf32, #tpu.memory_space<vmem>>, vector<1x128xf32>
    %4 = vector.broadcast %3 : vector<1x128xf32> to vector<128x128xf32>
    %5 = arith.addf %2, %4 : vector<128x128xf32>
    %c0_5 = arith.constant 0 : index
    %c0_6 = arith.constant 0 : index
    %6 = vector.load %arg5[%c0_5, %c0_6] : memref<128x128xf32, #tpu.memory_space<vmem>>, vector<128x128xf32>
    tpu.vector_store %arg5[%c0_5, %c0_6], %5 {strides = array<i32>} : memref<128x128xf32, #tpu.memory_space<vmem>>, vector<128x128xf32>,
    return
  }
  func.func @transform_0(%arg0: i32, %arg1: i32) -> (i32, i32) {
    %c0_i32 = arith.constant 0 : i32
    %c0_i32_0 = arith.constant 0 : i32
    return %arg0, %c0_i32 : i32, i32
  }
  func.func @transform_1(%arg0: i32, %arg1: i32) -> (i32, i32) {
    %c0_i32 = arith.constant 0 : i32
    %c0_i32_0 = arith.constant 0 : i32
    return %c0_i32, %arg1 : i32, i32
  }
  func.func @transform_2(%arg0: i32, %arg1: i32) -> (i32, i32) {
    %c0_i32 = arith.constant 0 : i32
    %c0_i32_0 = arith.constant 0 : i32
    return %c0_i32, %arg1 : i32, i32
  }
  func.func @transform_3(%arg0: i32, %arg1: i32) -> (i32, i32) {
    %c0_i32 = arith.constant 0 : i32
    return %arg0, %arg1 : i32, i32
  }
}

</mosaic_0001>

<llo_original>
// kernel: tpu_custom_call.1
$region0: #{tpu_custom_call.1}
  #allocation0 [shape = 'u32[]', space=smem, size = 0x4, offset = 0x4, fixed_abs, tag = 'smem constant byte address 0x4 - core index']
  #allocation1 [shape = 'u32[144,128]{1,0:T(1,128)}', space=vmem, size = 0x12000, scoped, tag = 'internal scratch']
  %s0 = inlined_call_operand.vmem [shape: bf16[128,36], index: 0, kind: input, shape index: {}]
  %s1 = inlined_call_operand.vmem [shape: bf16[36,128], index: 1, kind: input, shape index: {}]
  %s2 = inlined_call_operand.vmem [shape: f32[1,128], index: 2, kind: input, shape index: {}]
  %s3 = inlined_call_operand.hbm [shape: f32[128,128], index: 3, kind: output, shape index: {}]
  %s4 = sld [smem:[#allocation0]]
  $region22: #{tpu_custom_call.1} parent=0
    _
  %s6 = ssub.s32 1, %s4
  %s7 = scalar_select 0, %s6, %s4
  $region1: #{tpu_custom_call.1} parent=0
    #allocation2 [shape = 'u8[65536]{0}', space=vmem, size = 0x10000, scoped, tag = 'output window, operand 0, single buffered']
    #allocation3 [shape = 's32[1]{0}', space=sflag, size = 0x4, scoped, tag = 'scoped memory for tpu_custom_call.1']
    %8 = vsyncpa [#allocation3], 0
    // Predicated region
    $region2: #{tpu_custom_call.1} parent=1 // pred_check
      _
    $region3: #{tpu_custom_call.1} parent=1 // pred_check_branch
      %10 = sbr.rel (0) target = $region5
    $region4: #{tpu_custom_call.1} parent=1 // pred_region
      _
    $region5: #{tpu_custom_call.1} parent=1 // pred_fallthru
      _
    // Predicated region
    $region6: #{tpu_custom_call.1} parent=1 // pred_check
      _
    $region7: #{tpu_custom_call.1} parent=1 // pred_check_branch
      %12 = sbr.rel (0) target = $region9
    $region8: #{tpu_custom_call.1} parent=1 // pred_region
      _
    $region9: #{tpu_custom_call.1} parent=1 // pred_fallthru
      _
    // Predicated region
    $region10: #{tpu_custom_call.1} parent=1 // pred_check
      _
    $region11: #{tpu_custom_call.1} parent=1 // pred_check_branch
      %14 = sbr.rel (0) target = $region13
    $region12: #{tpu_custom_call.1} parent=1 // pred_region
      _
    $region13: #{tpu_custom_call.1} parent=1 // pred_fallthru
      _
    %v16 = vld [vmem:[%s0] sm:$0xf]
    %v17 = vld [vmem:[%s0 + $0x4] sm:$0xf]
    %v18 = vld [vmem:[%s0 + $0x8] sm:$0xf]
    %v19 = vld [vmem:[%s0 + $0xc] sm:$0xf]
    %v20 = vld [vmem:[%s0 + $0x10] sm:$0xf]
    %v21 = vld [vmem:[%s0 + $0x14] sm:$0xf]
    %v22 = vld [vmem:[%s0 + $0x18] sm:$0xf]
    %v23 = vld [vmem:[%s0 + $0x1c] sm:$0xf]
    %v24 = vld [vmem:[%s0 + $0x20] sm:$0xf]
    %v25 = vld [vmem:[%s0 + $0x24] sm:$0xf]
    %v26 = vld [vmem:[%s0 + $0x28] sm:$0xf]
    %v27 = vld [vmem:[%s0 + $0x2c] sm:$0xf]
    %v28 = vld [vmem:[%s0 + $0x30] sm:$0xf]
    %v29 = vld [vmem:[%s0 + $0x34] sm:$0xf]
    %v30 = vld [vmem:[%s0 + $0x38] sm:$0xf]
    %v31 = vld [vmem:[%s0 + $0x3c] sm:$0xf]
    %v32 = vld [vmem:[%s1] sm:$0xf]
    %v33 = vld [vmem:[%s1 + $0x4] sm:$0xf]
    %v34 = vld [vmem:[%s1 + $0x8] sm:$0xf]
    %v35 = vld [vmem:[%s1 + $0xc] sm:$0xf]
    %v36 = vld [vmem:[%s1 + $0x10] sm:$0x3]
    %v37 = vld [vmem:[%s2] sm:$0x1]
    %v39 = vlaneseq
    %v40 = vshrl.u32 %v39, 7
    %v41 = vsub.s32 0, %v40
    %v42 = vrot.slane %v37, %v41
    %v60 = vunpack.c.l.b16 %v16
    %v61 = vunpack.c.l.b16 %v17
    %v62 = vunpack.c.l.b16 %v18
    %v63 = vunpack.c.l.b16 %v19
    %v64 = vunpack.c.l.b16 %v20
    %v65 = vunpack.c.l.b16 %v21
    %v66 = vunpack.c.l.b16 %v22
    %v67 = vunpack.c.l.b16 %v23
    %v68 = vunpack.c.l.b16 %v24
    %v69 = vunpack.c.l.b16 %v25
    %v70 = vunpack.c.l.b16 %v26
    %v71 = vunpack.c.l.b16 %v27
    %v72 = vunpack.c.l.b16 %v28
    %v73 = vunpack.c.l.b16 %v29
    %v74 = vunpack.c.l.b16 %v30
    %v75 = vunpack.c.l.b16 %v31
    %v76 = vpack.c.b16 %v61, %v60
    %v77 = vpack.c.b16 %v63, %v62
    %v78 = vpack.c.b16 %v65, %v64
    %v79 = vpack.c.b16 %v67, %v66
    %v80 = vpack.c.b16 %v69, %v68
    %v81 = vpack.c.b16 %v71, %v70
    %v82 = vpack.c.b16 %v73, %v72
    %v83 = vpack.c.b16 %v75, %v74
    %v89 = vunpack.c.l.b16 %v32
    %v90 = vunpack.c.l.b16 %v33
    %v91 = vunpack.c.l.b16 %v34
    %v92 = vunpack.c.l.b16 %v35
    %v93 = vunpack.c.l.b16 %v36
    %v94 = vpack.c.b16 %v90, %v89
    %v95 = vpack.c.b16 %v92, %v91
    %v96 = vpack.c.b16 %v93, %v93
    %vm99 = vcmask 293888
    %v101 = vsel %vm99, %v76, 0
    %v104 = vsel %vm99, %v77, 0
    %v107 = vsel %vm99, %v78, 0
    %v110 = vsel %vm99, %v79, 0
    %v113 = vsel %vm99, %v80, 0
    %v116 = vsel %vm99, %v81, 0
    %v119 = vsel %vm99, %v82, 0
    %v122 = vsel %vm99, %v83, 0
    %vm124 = vcmask 1041408
    %v126 = vsel %vm124, %v96, 0
    %128 = vmatprep.subr.bf16.mxu0 0
    %129 = vmatpush1.bf16.msra.mxu0 %v94
    %130 = vmatprep.subr.bf16.mxu0 0
    %131 = vmatpush1.bf16.msra.mxu0 %v95
    %132 = vmatprep.subr.bf16.mxu0 0
    %133 = vmatpush1.bf16.msra.mxu0 %v126
    %134 = vmatprep.subr.bf16.mxu0 0
    %135 = vmatpush1.bf16.msra.mxu0 0
    %136 = vmatprep.subr.bf16.mxu0 0
    %137 = vmatpush1.bf16.msra.mxu0 0
    %138 = vmatprep.subr.bf16.mxu0 0
    %139 = vmatpush1.bf16.msra.mxu0 0
    %140 = vmatprep.subr.bf16.mxu0 0
    %141 = vmatpush1.bf16.msra.mxu0 0
    %142 = vmatprep.subr.bf16.mxu0 0
    %143 = vmatpush1.bf16.msra.mxu0 0
    %144 = vmatprep.subr.bf16.mxu0 0
    %145 = vmatpush1.bf16.msra.mxu0 0
    %146 = vmatprep.subr.bf16.mxu0 0
    %147 = vmatpush1.bf16.msra.mxu0 0
    %148 = vmatprep.subr.bf16.mxu0 0
    %149 = vmatpush1.bf16.msra.mxu0 0
    %150 = vmatprep.subr.bf16.mxu0 0
    %151 = vmatpush1.bf16.msra.mxu0 0
    %152 = vmatprep.subr.bf16.mxu0 0
    %153 = vmatpush1.bf16.msra.mxu0 0
    %154 = vmatprep.subr.bf16.mxu0 0
    %155 = vmatpush1.bf16.msra.mxu0 0
    %156 = vmatprep.subr.bf16.mxu0 0
    %157 = vmatpush1.bf16.msra.mxu0 0
    %158 = vmatprep.subr.bf16.mxu0 0
    %159 = vmatpush1.bf16.msra.mxu0 0
    %160 = vmatprep.mubr.bf16.mxu0 0
    %161 = vmatmul.mubr.bf16.gmra.mrb[0].mxu0 %v101
    %v162 = vpop.f32.mrb[0].mxu0
    %v163 = vadd.f32 %v42, %v162
    %v164 = vpop.f32.mrb[0].mxu0
    %v165 = vpop.f32.mrb[0].mxu0
    %v166 = vadd.f32 %v42, %v165
    %v167 = vpop.f32.mrb[0].mxu0
    %168 = vmatprep.mubr.bf16.mxu0 0
    %169 = vmatmul.mubr.bf16.gmra.mrb[0].mxu0 %v104
    %v170 = vpop.f32.mrb[0].mxu0
    %v171 = vadd.f32 %v42, %v170
    %v172 = vpop.f32.mrb[0].mxu0
    %v173 = vpop.f32.mrb[0].mxu0
    %v174 = vadd.f32 %v42, %v173
    %v175 = vpop.f32.mrb[0].mxu0
    %176 = vmatprep.mubr.bf16.mxu0 0
    %177 = vmatmul.mubr.bf16.gmra.mrb[0].mxu0 %v107
    %v178 = vpop.f32.mrb[0].mxu0
    %v179 = vadd.f32 %v42, %v178
    %v180 = vpop.f32.mrb[0].mxu0
    %v181 = vpop.f32.mrb[0].mxu0
    %v182 = vadd.f32 %v42, %v181
    %v183 = vpop.f32.mrb[0].mxu0
    %184 = vmatprep.mubr.bf16.mxu0 0
    %185 = vmatmul.mubr.bf16.gmra.mrb[0].mxu0 %v110
    %v186 = vpop.f32.mrb[0].mxu0
    %v187 = vadd.f32 %v42, %v186
    %v188 = vpop.f32.mrb[0].mxu0
    %v189 = vpop.f32.mrb[0].mxu0
    %v190 = vadd.f32 %v42, %v189
    %v191 = vpop.f32.mrb[0].mxu0
    %192 = vmatprep.mubr.bf16.mxu0 0
    %193 = vmatmul.mubr.bf16.gmra.mrb[0].mxu0 %v113
    %v194 = vpop.f32.mrb[0].mxu0
    %v195 = vadd.f32 %v42, %v194
    %v196 = vpop.f32.mrb[0].mxu0
    %v197 = vpop.f32.mrb[0].mxu0
    %v198 = vadd.f32 %v42, %v197
    %v199 = vpop.f32.mrb[0].mxu0
    %200 = vmatprep.mubr.bf16.mxu0 0
    %201 = vmatmul.mubr.bf16.gmra.mrb[0].mxu0 %v116
    %v202 = vpop.f32.mrb[0].mxu0
    %v203 = vadd.f32 %v42, %v202
    %v204 = vpop.f32.mrb[0].mxu0
    %v205 = vpop.f32.mrb[0].mxu0
    %v206 = vadd.f32 %v42, %v205
    %v207 = vpop.f32.mrb[0].mxu0
    %208 = vmatprep.mubr.bf16.mxu0 0
    %209 = vmatmul.mubr.bf16.gmra.mrb[0].mxu0 %v119
    %v210 = vpop.f32.mrb[0].mxu0
    %v211 = vadd.f32 %v42, %v210
    %v212 = vpop.f32.mrb[0].mxu0
    %v213 = vpop.f32.mrb[0].mxu0
    %v214 = vadd.f32 %v42, %v213
    %v215 = vpop.f32.mrb[0].mxu0
    %216 = vmatprep.mubr.bf16.mxu0 0
    %217 = vmatmul.mubr.bf16.gmra.mrb[0].mxu0 %v122
    %v218 = vpop.f32.mrb[0].mxu0
    %v219 = vadd.f32 %v42, %v218
    %v220 = vpop.f32.mrb[0].mxu0
    %v221 = vpop.f32.mrb[0].mxu0
    %v222 = vadd.f32 %v42, %v221
    %v223 = vpop.f32.mrb[0].mxu0
    %224 = vdwg.mxu0
    %225 = vst [vmem:[#allocation2] sm:$0xff] %v163
    %226 = vst [vmem:[#allocation2 + $0x8] sm:$0xff] %v166
    %227 = vst [vmem:[#allocation2 + $0x10] sm:$0xff] %v171
    %228 = vst [vmem:[#allocation2 + $0x18] sm:$0xff] %v174
    %229 = vst [vmem:[#allocation2 + $0x20] sm:$0xff] %v179
    %230 = vst [vmem:[#allocation2 + $0x28] sm:$0xff] %v182
    %231 = vst [vmem:[#allocation2 + $0x30] sm:$0xff] %v187
    %232 = vst [vmem:[#allocation2 + $0x38] sm:$0xff] %v190
    %233 = vst [vmem:[#allocation2 + $0x40] sm:$0xff] %v195
    %234 = vst [vmem:[#allocation2 + $0x48] sm:$0xff] %v198
    %235 = vst [vmem:[#allocation2 + $0x50] sm:$0xff] %v203
    %236 = vst [vmem:[#allocation2 + $0x58] sm:$0xff] %v206
    %237 = vst [vmem:[#allocation2 + $0x60] sm:$0xff] %v211
    %238 = vst [vmem:[#allocation2 + $0x68] sm:$0xff] %v214
    %239 = vst [vmem:[#allocation2 + $0x70] sm:$0xff] %v219
    %240 = vst [vmem:[#allocation2 + $0x78] sm:$0xff] %v222
    // Predicated region
    $region14: #{tpu_custom_call.1} parent=1 // pred_check
      _
    $region15: #{tpu_custom_call.1} parent=1 // pred_check_branch
      %242 = sbr.rel (0) target = $region17
    $region16: #{tpu_custom_call.1} parent=1 // pred_region
      %s244 = ssub.s32 2048, 2048
      %245 = vsyncadd [#allocation3], %s244
      %s246 = sshll.u32 [#allocation2], 4
      %s247 = int_to_ptr.vmem [resolvable:$true] %s246
      %252 = dma.vmem_to_hbm [thread:$0]  %s247, 2048, %s3, [#allocation3], 128, 128, 8
    $region17: #{tpu_custom_call.1} parent=1 // pred_fallthru
      _
    // Predicated region
    $region18: #{tpu_custom_call.1} parent=1 // pred_check
      _
    $region19: #{tpu_custom_call.1} parent=1 // pred_check_branch
      %254 = sbr.rel (0) target = $region21
    $region20: #{tpu_custom_call.1} parent=1 // pred_region
      %255 = dma.done [#allocation3], 2048
    $region21: #{tpu_custom_call.1} parent=1 // pred_fallthru
      _
    %256 = vsyncpa [#allocation3], 1

</llo_original>
